<compile_context>
chip_gen: v7x
topology: tpu7x:2x2x1
jax: 0.10.0
libtpu: 0.0.40
codegen_flags: <defaults>
</compile_context>

<pallas_src>
import jax
import jax.numpy as jnp
from jax.experimental import pallas as pl
from jax.experimental.pallas import tpu as pltpu


# ----------------------------- fused Pallas kernel ---------------------------

def _fused_mlp_kernel(x_ref, w1_ref, b1_ref, w2_ref, b2_ref, o_ref):
    """One batch tile: o = sigmoid(relu(x @ W1 + b1) @ W2 + b2).

    x:(TB, D_in) f32   w1:(D_in, H) bf16   b1:(1, H) f32
    w2:(H, D_out) bf16 b2:(1, D_out) f32   o:(TB, D_out) f32
    """
    x = x_ref[...].astype(jnp.bfloat16)
    h = jnp.dot(x, w1_ref[...], preferred_element_type=jnp.float32)
    h = jnp.maximum(h + b1_ref[...], 0.0)                       # relu (f32)
    o = jnp.dot(h.astype(jnp.bfloat16), w2_ref[...],
                preferred_element_type=jnp.float32)
    o_ref[...] = jax.nn.sigmoid(o + b2_ref[...]).astype(o_ref.dtype)


# --------------------------------- wrapper -----------------------------------

def simple_nn_forward(params, x, *, batch_tile=8):
    """x: (B, input_dim) float32 -> (B, output_dim) float32."""
    B, D_in = x.shape
    H = params["W1"].shape[1]
    D_out = params["W2"].shape[1]

    # Pad batch to a multiple of the tile (tile's 2nd-to-last dim must be a
    # multiple of 8 or equal the full dim); padding rows are sliced off below.
    TB = batch_tile
    B_pad = ((B + TB - 1) // TB) * TB
    x = x.astype(jnp.float32)
    if B_pad != B:
        x = jnp.pad(x, ((0, B_pad - B), (0, 0)))

    # Weights cast once outside the kernel; biases as (1, N) rows for VPU add.
    w1 = params["W1"].astype(jnp.bfloat16)
    w2 = params["W2"].astype(jnp.bfloat16)
    b1 = params["b1"].reshape(1, H).astype(jnp.float32)
    b2 = params["b2"].reshape(1, D_out).astype(jnp.float32)

    out = pl.pallas_call(
        _fused_mlp_kernel,
        out_shape=jax.ShapeDtypeStruct((B_pad, D_out), jnp.float32),
        grid_spec=pltpu.PrefetchScalarGridSpec(
            num_scalar_prefetch=0,
            grid=(B_pad // TB,),
            in_specs=[
                pl.BlockSpec((TB, D_in), lambda i: (i, 0)),   # X batch tile
                pl.BlockSpec((D_in, H), lambda i: (0, 0)),    # W1 (resident)
                pl.BlockSpec((1, H), lambda i: (0, 0)),       # b1 (resident)
                pl.BlockSpec((H, D_out), lambda i: (0, 0)),   # W2 (resident)
                pl.BlockSpec((1, D_out), lambda i: (0, 0)),   # b2 (resident)
            ],
            out_specs=pl.BlockSpec((TB, D_out), lambda i: (i, 0)),
        ),
        compiler_params=pltpu.CompilerParams(
            dimension_semantics=("parallel",)),  # v7x: shard batch over 2 TCs
    )(x, w1, b1, w2, b2)

    return out[:B]


# ------------------------------ params / reference ---------------------------

def init_params(key, input_dim, h_dim, output_dim):
    """Mirrors torch: randn(...) * 0.075 for W1, b1, W2, b2."""
    k1, k2, k3, k4 = jax.random.split(key, 4)
    return {
        "W1": jax.random.normal(k1, (input_dim, h_dim), jnp.float32) * 0.075,
        "b1": jax.random.normal(k2, (h_dim,), jnp.float32) * 0.075,
        "W2": jax.random.normal(k3, (h_dim, output_dim), jnp.float32) * 0.075,
        "b2": jax.random.normal(k4, (output_dim,), jnp.float32) * 0.075,
    }


def ref_forward(params, x):
    h = jax.nn.relu(x @ params["W1"] + params["b1"])
    return jax.nn.sigmoid(h @ params["W2"] + params["b2"])


# ----------------------------------- main ------------------------------------

if __name__ == "__main__":
    key = jax.random.PRNGKey(0)
    pkey, xkey = jax.random.split(key)

    B, D_IN, H_DIM, D_OUT = 64, 16, 32, 4
    params = init_params(pkey, D_IN, H_DIM, D_OUT)
    x = jax.random.normal(xkey, (B, D_IN), jnp.float32)

    fwd = jax.jit(simple_nn_forward)
    y = fwd(params, x)
    jax.block_until_ready(y)

    y_ref = ref_forward(params, x)
    assert y.shape == (B, D_OUT)
    assert bool(jnp.all((y >= 0.0) & (y <= 1.0)))          # sigmoid range
    assert bool(jnp.max(jnp.abs(y - y_ref)) < 1e-2)        # bf16-MXU tolerance
    print("KERNEL_OK")
</pallas_src>

<mosaic_0001>
module attributes {stable_mosaic.version = 11 : i64} {
  func.func @_fused_mlp_kernel(%arg0: i32, %arg1: memref<8x16xf32, #tpu.memory_space<vmem>>, %arg2: memref<16x32xbf16, #tpu.memory_space<vmem>>, %arg3: memref<1x32xf32, #tpu.memory_space<vmem>>, %arg4: memref<32x4xbf16, #tpu.memory_space<vmem>>, %arg5: memref<1x4xf32, #tpu.memory_space<vmem>>, %arg6: memref<8x4xf32, #tpu.memory_space<vmem>>) attributes {dimension_semantics = [#tpu.dimension_semantics<parallel>], iteration_bounds = array<i64: 8>, scalar_prefetch = 0 : i64, scratch_operands = 0 : i64, tpu.core_type = #tpu.core_type<tc>, window_params = [{transform_indices = @transform_0, window_bounds = array<i64: 8, 16>}, {pipeline_mode = #tpu.pipeline_mode<synchronous>, transform_indices = @transform_1, window_bounds = array<i64: 16, 32>}, {pipeline_mode = #tpu.pipeline_mode<synchronous>, transform_indices = @transform_2, window_bounds = array<i64: 1, 32>}, {pipeline_mode = #tpu.pipeline_mode<synchronous>, transform_indices = @transform_3, window_bounds = array<i64: 32, 4>}, {pipeline_mode = #tpu.pipeline_mode<synchronous>, transform_indices = @transform_4, window_bounds = array<i64: 1, 4>}, {transform_indices = @transform_5, window_bounds = array<i64: 8, 4>}]} {
    %c0 = arith.constant 0 : index
    %c0_0 = arith.constant 0 : index
    %0 = vector.load %arg1[%c0, %c0_0] : memref<8x16xf32, #tpu.memory_space<vmem>>, vector<8x16xf32>
    %1 = arith.truncf %0 : vector<8x16xf32> to vector<8x16xbf16>
    %c0_1 = arith.constant 0 : index
    %c0_2 = arith.constant 0 : index
    %2 = vector.load %arg2[%c0_1, %c0_2] : memref<16x32xbf16, #tpu.memory_space<vmem>>, vector<16x32xbf16>
    %cst = arith.constant dense<0.000000e+00> : vector<8x32xf32>
    %3 = tpu.matmul %1, %2, %cst {dimension_numbers = #tpu.dot_dimension_numbers<[1], [0], [0], [1], [0, 0, 1, 1], [], []>} : vector<8x16xbf16>, vector<16x32xbf16>, vector<8x32xf32> -> vector<8x32xf32>
    %c0_3 = arith.constant 0 : index
    %c0_4 = arith.constant 0 : index
    %4 = vector.load %arg3[%c0_3, %c0_4] : memref<1x32xf32, #tpu.memory_space<vmem>>, vector<1x32xf32>
    %5 = vector.broadcast %4 : vector<1x32xf32> to vector<8x32xf32>
    %6 = arith.addf %3, %5 : vector<8x32xf32>
    %cst_5 = arith.constant 0.000000e+00 : f32
    %7 = vector.broadcast %cst_5 : f32 to vector<8x32xf32>
    %8 = arith.maximumf %6, %7 : vector<8x32xf32>
    %9 = arith.truncf %8 : vector<8x32xf32> to vector<8x32xbf16>
    %c0_6 = arith.constant 0 : index
    %c0_7 = arith.constant 0 : index
    %10 = vector.load %arg4[%c0_6, %c0_7] : memref<32x4xbf16, #tpu.memory_space<vmem>>, vector<32x4xbf16>
    %cst_8 = arith.constant dense<0.000000e+00> : vector<8x4xf32>
    %11 = tpu.matmul %9, %10, %cst_8 {dimension_numbers = #tpu.dot_dimension_numbers<[1], [0], [0], [1], [0, 0, 1, 1], [], []>} : vector<8x32xbf16>, vector<32x4xbf16>, vector<8x4xf32> -> vector<8x4xf32>
    %c0_9 = arith.constant 0 : index
    %c0_10 = arith.constant 0 : index
    %12 = vector.load %arg5[%c0_9, %c0_10] : memref<1x4xf32, #tpu.memory_space<vmem>>, vector<1x4xf32>
    %13 = vector.broadcast %12 : vector<1x4xf32> to vector<8x4xf32>
    %14 = arith.addf %11, %13 : vector<8x4xf32>
    %15 = arith.negf %14 : vector<8x4xf32>
    %16 = math.exp %15 : vector<8x4xf32>
    %cst_11 = arith.constant 1.000000e+00 : f32
    %17 = vector.broadcast %cst_11 : f32 to vector<8x4xf32>
    %18 = arith.addf %17, %16 : vector<8x4xf32>
    %19 = arith.divf %17, %18 : vector<8x4xf32>
    %c0_12 = arith.constant 0 : index
    %c0_13 = arith.constant 0 : index
    %20 = vector.load %arg6[%c0_12, %c0_13] : memref<8x4xf32, #tpu.memory_space<vmem>>, vector<8x4xf32>
    tpu.vector_store %arg6[%c0_12, %c0_13], %19 {strides = array<i32>} : memref<8x4xf32, #tpu.memory_space<vmem>>, vector<8x4xf32>,
    return
  }
  func.func @transform_0(%arg0: i32) -> (i32, i32) {
    %c0_i32 = arith.constant 0 : i32
    %c0_i32_0 = arith.constant 0 : i32
    return %arg0, %c0_i32 : i32, i32
  }
  func.func @transform_1(%arg0: i32) -> (i32, i32) {
    %c0_i32 = arith.constant 0 : i32
    %c0_i32_0 = arith.constant 0 : i32
    %c0_i32_1 = arith.constant 0 : i32
    return %c0_i32, %c0_i32_0 : i32, i32
  }
  func.func @transform_2(%arg0: i32) -> (i32, i32) {
    %c0_i32 = arith.constant 0 : i32
    %c0_i32_0 = arith.constant 0 : i32
    %c0_i32_1 = arith.constant 0 : i32
    return %c0_i32, %c0_i32_0 : i32, i32
  }
  func.func @transform_3(%arg0: i32) -> (i32, i32) {
    %c0_i32 = arith.constant 0 : i32
    %c0_i32_0 = arith.constant 0 : i32
    %c0_i32_1 = arith.constant 0 : i32
    return %c0_i32, %c0_i32_0 : i32, i32
  }
  func.func @transform_4(%arg0: i32) -> (i32, i32) {
    %c0_i32 = arith.constant 0 : i32
    %c0_i32_0 = arith.constant 0 : i32
    %c0_i32_1 = arith.constant 0 : i32
    return %c0_i32, %c0_i32_0 : i32, i32
  }
  func.func @transform_5(%arg0: i32) -> (i32, i32) {
    %c0_i32 = arith.constant 0 : i32
    %c0_i32_0 = arith.constant 0 : i32
    return %arg0, %c0_i32 : i32, i32
  }
}

</mosaic_0001>

<llo_original>
// kernel: simple_nn_forward.1
$region0: #{simple_nn_forward.1}
  #allocation0 [shape = 'u32[]', space=smem, size = 0x4, offset = 0x4, fixed_abs, tag = 'smem constant byte address 0x4 - core index']
  #allocation1 [shape = 'u32[144,128]{1,0:T(1,128)}', space=vmem, size = 0x12000, scoped, tag = 'internal scratch']
  %s0 = inlined_call_operand.vmem [shape: f32[64,16], index: 0, kind: input, shape index: {}]
  %s1 = inlined_call_operand.vmem [shape: bf16[16,32], index: 1, kind: input, shape index: {}]
  %s2 = inlined_call_operand.vmem [shape: f32[1,32], index: 2, kind: input, shape index: {}]
  %s3 = inlined_call_operand.vmem [shape: bf16[32,4], index: 3, kind: input, shape index: {}]
  %s4 = inlined_call_operand.vmem [shape: f32[1,4], index: 4, kind: input, shape index: {}]
  %s5 = inlined_call_operand.vmem [shape: f32[64,4], index: 5, kind: output, shape index: {}]
  %s6 = sld [smem:[#allocation0]]
  $region53: #{simple_nn_forward.1} parent=0
    _
  %s8 = ssub.s32 1, %s6
  %s9 = scalar_select 0, %s8, %s6
  loop: start=0, step=1, limit=10
  $region2: #{simple_nn_forward.1} parent=0 // loop_pre_header
    _
  $region3: #{simple_nn_forward.1} parent=0 // loop_header
    %s11 = sphi 0, %s15
    %p12 = scmp.ge.s32.totalorder %s11, 10
    %s21 = sphi 0, %s23
    %s24 = sphi 0, %s21
    %s25 = sphi 0, %s24
    %s41 = sphi 0, %s25
    %s45 = sphi 0, %s45
    %s47 = sphi 0, %s45
    %s48 = sphi 0, %s47
    %s62 = sphi 0, %s48
    %s66 = sphi 0, %s66
    %s68 = sphi 0, %s66
    %s69 = sphi 0, %s68
    %s83 = sphi 0, %s69
    %s87 = sphi 0, %s87
    %s89 = sphi 0, %s87
    %s90 = sphi 0, %s89
    %s104 = sphi 0, %s90
    %s108 = sphi 0, %s108
    %s110 = sphi 0, %s108
    %s111 = sphi 0, %s110
    %s125 = sphi 0, %s111
    %s131 = sphi 0, %s133
    %s134 = sphi 0, %s131
    %s135 = sphi 0, %s134
    %s151 = sphi 0, %s135
  $region4: #{simple_nn_forward.1} parent=0 // loop_header_branch
    %14 = sbr.rel (%p12) target = $region8
  $region5: #{simple_nn_forward.1} parent=0 // loop_body
    %s16 = ssub.s32 %s11, 1
    %s17 = ssub.s32 %s11, 2
    %s18 = sadd.s32 %s11, 1
    %s19 = ssub.s32 %s11, %s18
    %p20 = scmp.eq.s32.totalorder %s19, 0
    %s22 = sadd.s32 %s21, 1
    %s23 = scalar_select %p20, %s21, %s22
    %p26 = pneg %p20
    %p27 = scmp.eq.s32.totalorder %s11, 7
    %p28 = por %p26, %p27
    %p29 = scmp.ne.s32.totalorder %s21, %s24
    %p30 = scmp.eq.s32.totalorder %s11, 0
    %p31 = por %p29, %p30
    %p32 = scmp.ne.s32.totalorder %s21, %s24
    %p33 = scmp.eq.s32.totalorder %s16, 7
    %p34 = por %p32, %p33
    %p35 = scmp.ne.s32.totalorder %s24, %s25
    %p36 = scmp.eq.s32.totalorder %s16, 0
    %p37 = por %p35, %p36
    %p38 = scmp.ne.s32.totalorder %s24, %s25
    %p39 = scmp.eq.s32.totalorder %s17, 7
    %p40 = por %p38, %p39
    %p42 = scmp.ne.s32.totalorder %s25, %s41
    %p43 = scmp.eq.s32.totalorder %s17, 0
    %p44 = por %p42, %p43
    %s46 = sadd.s32 %s45, 1
    %p49 = scmp.eq.s32.totalorder %s11, 7
    %p50 = scmp.ne.s32.totalorder %s45, %s47
    %p51 = scmp.eq.s32.totalorder %s11, 0
    %p52 = por %p50, %p51
    %p53 = scmp.ne.s32.totalorder %s45, %s47
    %p54 = scmp.eq.s32.totalorder %s16, 7
    %p55 = por %p53, %p54
    %p56 = scmp.ne.s32.totalorder %s47, %s48
    %p57 = scmp.eq.s32.totalorder %s16, 0
    %p58 = por %p56, %p57
    %p59 = scmp.ne.s32.totalorder %s47, %s48
    %p60 = scmp.eq.s32.totalorder %s17, 7
    %p61 = por %p59, %p60
    %p63 = scmp.ne.s32.totalorder %s48, %s62
    %p64 = scmp.eq.s32.totalorder %s17, 0
    %p65 = por %p63, %p64
    %s67 = sadd.s32 %s66, 1
    %p70 = scmp.eq.s32.totalorder %s11, 7
    %p71 = scmp.ne.s32.totalorder %s66, %s68
    %p72 = scmp.eq.s32.totalorder %s11, 0
    %p73 = por %p71, %p72
    %p74 = scmp.ne.s32.totalorder %s66, %s68
    %p75 = scmp.eq.s32.totalorder %s16, 7
    %p76 = por %p74, %p75
    %p77 = scmp.ne.s32.totalorder %s68, %s69
    %p78 = scmp.eq.s32.totalorder %s16, 0
    %p79 = por %p77, %p78
    %p80 = scmp.ne.s32.totalorder %s68, %s69
    %p81 = scmp.eq.s32.totalorder %s17, 7
    %p82 = por %p80, %p81
    %p84 = scmp.ne.s32.totalorder %s69, %s83
    %p85 = scmp.eq.s32.totalorder %s17, 0
    %p86 = por %p84, %p85
    %s88 = sadd.s32 %s87, 1
    %p91 = scmp.eq.s32.totalorder %s11, 7
    %p92 = scmp.ne.s32.totalorder %s87, %s89
    %p93 = scmp.eq.s32.totalorder %s11, 0
    %p94 = por %p92, %p93
    %p95 = scmp.ne.s32.totalorder %s87, %s89
    %p96 = scmp.eq.s32.totalorder %s16, 7
    %p97 = por %p95, %p96
    %p98 = scmp.ne.s32.totalorder %s89, %s90
    %p99 = scmp.eq.s32.totalorder %s16, 0
    %p100 = por %p98, %p99
    %p101 = scmp.ne.s32.totalorder %s89, %s90
    %p102 = scmp.eq.s32.totalorder %s17, 7
    %p103 = por %p101, %p102
    %p105 = scmp.ne.s32.totalorder %s90, %s104
    %p106 = scmp.eq.s32.totalorder %s17, 0
    %p107 = por %p105, %p106
    %s109 = sadd.s32 %s108, 1
    %p112 = scmp.eq.s32.totalorder %s11, 7
    %p113 = scmp.ne.s32.totalorder %s108, %s110
    %p114 = scmp.eq.s32.totalorder %s11, 0
    %p115 = por %p113, %p114
    %p116 = scmp.ne.s32.totalorder %s108, %s110
    %p117 = scmp.eq.s32.totalorder %s16, 7
    %p118 = por %p116, %p117
    %p119 = scmp.ne.s32.totalorder %s110, %s111
    %p120 = scmp.eq.s32.totalorder %s16, 0
    %p121 = por %p119, %p120
    %p122 = scmp.ne.s32.totalorder %s110, %s111
    %p123 = scmp.eq.s32.totalorder %s17, 7
    %p124 = por %p122, %p123
    %p126 = scmp.ne.s32.totalorder %s111, %s125
    %p127 = scmp.eq.s32.totalorder %s17, 0
    %p128 = por %p126, %p127
    %s129 = ssub.s32 %s11, %s18
    %p130 = scmp.eq.s32.totalorder %s129, 0
    %s132 = sadd.s32 %s131, 1
    %s133 = scalar_select %p130, %s131, %s132
    %p136 = pneg %p130
    %p137 = scmp.eq.s32.totalorder %s11, 7
    %p138 = por %p136, %p137
    %p139 = scmp.ne.s32.totalorder %s131, %s134
    %p140 = scmp.eq.s32.totalorder %s11, 0
    %p141 = por %p139, %p140
    %p142 = scmp.ne.s32.totalorder %s131, %s134
    %p143 = scmp.eq.s32.totalorder %s16, 7
    %p144 = por %p142, %p143
    %p145 = scmp.ne.s32.totalorder %s134, %s135
    %p146 = scmp.eq.s32.totalorder %s16, 0
    %p147 = por %p145, %p146
    %p148 = scmp.ne.s32.totalorder %s134, %s135
    %p149 = scmp.eq.s32.totalorder %s17, 7
    %p150 = por %p148, %p149
    %p152 = scmp.ne.s32.totalorder %s135, %s151
    %p153 = scmp.eq.s32.totalorder %s17, 0
    %p154 = por %p152, %p153
    %p155 = scmp.le.s32.totalorder 1, %s11
    %p156 = scmp.lt.s32.totalorder %s11, 9
    %p157 = pnand %p155, %p156
    %p158 = pneg %p157
    // Predicated region
    $region9: #{simple_nn_forward.1} parent=5 // pred_check
      _
    $region10: #{simple_nn_forward.1} parent=5 // pred_check_branch
      %160 = sbr.rel (%p157) target = $region12
    $region11: #{simple_nn_forward.1} parent=5 // pred_region
      %s161 = ssub.s32 %s11, 1
      // Predicated region
      $region13: #{simple_nn_forward.1} parent=11 // pred_check
        %p162 = pneg %p58
      $region14: #{simple_nn_forward.1} parent=11 // pred_check_branch
        %164 = sbr.rel (%p162) target = $region16
      $region15: #{simple_nn_forward.1} parent=11 // pred_region
        _
      $region16: #{simple_nn_forward.1} parent=11 // pred_fallthru
        _
      // Predicated region
      $region17: #{simple_nn_forward.1} parent=11 // pred_check
        %p165 = pneg %p79
      $region18: #{simple_nn_forward.1} parent=11 // pred_check_branch
        %167 = sbr.rel (%p165) target = $region20
      $region19: #{simple_nn_forward.1} parent=11 // pred_region
        _
      $region20: #{simple_nn_forward.1} parent=11 // pred_fallthru
        _
      // Predicated region
      $region21: #{simple_nn_forward.1} parent=11 // pred_check
        %p168 = pneg %p100
      $region22: #{simple_nn_forward.1} parent=11 // pred_check_branch
        %170 = sbr.rel (%p168) target = $region24
      $region23: #{simple_nn_forward.1} parent=11 // pred_region
        _
      $region24: #{simple_nn_forward.1} parent=11 // pred_fallthru
        _
      // Predicated region
      $region25: #{simple_nn_forward.1} parent=11 // pred_check
        %p171 = pneg %p121
      $region26: #{simple_nn_forward.1} parent=11 // pred_check_branch
        %173 = sbr.rel (%p171) target = $region28
      $region27: #{simple_nn_forward.1} parent=11 // pred_region
        _
      $region28: #{simple_nn_forward.1} parent=11 // pred_fallthru
        _
    $region12: #{simple_nn_forward.1} parent=5 // pred_fallthru
      _
    %p174 = scmp.lt.s32.totalorder %s11, 8
    // Predicated region
    $region29: #{simple_nn_forward.1} parent=5 // pred_check
      %p175 = pneg %p174
    $region30: #{simple_nn_forward.1} parent=5 // pred_check_branch
      %177 = sbr.rel (%p175) target = $region32
    $region31: #{simple_nn_forward.1} parent=5 // pred_region
      // Predicated region
      $region33: #{simple_nn_forward.1} parent=31 // pred_check
        %p178 = pneg %p31
      $region34: #{simple_nn_forward.1} parent=31 // pred_check_branch
        %180 = sbr.rel (%p178) target = $region36
      $region35: #{simple_nn_forward.1} parent=31 // pred_region
        %p181 = scmp.lt.s32.totalorder %s11, 7
        %s182 = scalar_select %p181, %s11, 7
        %s183 = smul.addr %s182, 8
        %s184 = scalar_lea.vmem %s0, %s183
      $region36: #{simple_nn_forward.1} parent=31 // pred_fallthru
        _
    $region32: #{simple_nn_forward.1} parent=5 // pred_fallthru
      _
    %p185 = scmp.le.s32.totalorder 1, %s11
    %p186 = scmp.lt.s32.totalorder %s11, 9
    %p187 = pnand %p185, %p186
    %p188 = pneg %p187
    // Predicated region
    $region37: #{simple_nn_forward.1} parent=5 // pred_check
      _
    $region38: #{simple_nn_forward.1} parent=5 // pred_check_branch
      %190 = sbr.rel (%p187) target = $region40
    $region39: #{simple_nn_forward.1} parent=5 // pred_region
      %s191 = ssub.s32 %s11, 1
      %p192 = scmp.lt.s32.totalorder %s16, 7
      %s193 = scalar_select %p192, %s16, 7
      %s194 = smul.addr %s193, 8
      %s195 = scalar_lea.vmem %s0, %s194
      %p196 = pneg %p37
      %p197 = pneg %p34
      %p198 = pneg %p58
      %p199 = pneg %p55
      %p200 = pneg %p79
      %p201 = pneg %p76
      %p202 = pneg %p100
      %p203 = pneg %p97
      %p204 = pneg %p121
      %p205 = pneg %p118
      %p206 = pneg %p147
      %p207 = pneg %p144
      %p208 = scmp.lt.s32.totalorder %s16, 7
      %s209 = scalar_select %p208, %s16, 7
      %s210 = smul.addr %s209, 8
      %s211 = scalar_lea.vmem %s5, %s210
      %p212 = scmp.lt.s32.totalorder %s16, 7
      %s213 = scalar_select %p212, %s16, 7
      %s214 = smul.addr %s213, 8
      %s215 = scalar_lea.vmem %s0, %s214
      %p216 = scmp.lt.s32.totalorder %s16, 7
      %s217 = scalar_select %p216, %s16, 7
      %s218 = smul.addr %s217, 8
      %s219 = scalar_lea.vmem %s5, %s218
      %v221 = vld [vmem:[%s215] sm:$0xff]
      %v222 = vpack.c.bf16 %v221, %v221
      %v223 = vld [vmem:[%s1] sm:$0xf]
      %v224 = vld [vmem:[%s1 + $0x4] sm:$0xf]
      %v225 = vld [vmem:[%s2] sm:$0x1]
      %v227 = vlaneseq
      %v228 = vshrl.u32 %v227, 7
      %v229 = vsub.s32 0, %v228
      %v230 = vrot.slane %v225, %v229
      %v234 = vunpack.c.l.b16 %v223
      %v235 = vunpack.c.l.b16 %v224
      %v236 = vpack.c.b16 %v235, %v234
      %vm238 = vcmask 130048
      %v240 = vsel %vm238, %v222, 0
      %242 = vmatprep.subr.bf16.mxu0 0
      %243 = vmatpush1.bf16.msra.mxu0 %v236
      %244 = vmatprep.subr.bf16.mxu0 0
      %245 = vmatpush1.bf16.msra.mxu0 0
      %246 = vmatprep.subr.bf16.mxu0 0
      %247 = vmatpush1.bf16.msra.mxu0 0
      %248 = vmatprep.subr.bf16.mxu0 0
      %249 = vmatpush1.bf16.msra.mxu0 0
      %250 = vmatprep.subr.bf16.mxu0 0
      %251 = vmatpush1.bf16.msra.mxu0 0
      %252 = vmatprep.subr.bf16.mxu0 0
      %253 = vmatpush1.bf16.msra.mxu0 0
      %254 = vmatprep.subr.bf16.mxu0 0
      %255 = vmatpush1.bf16.msra.mxu0 0
      %256 = vmatprep.subr.bf16.mxu0 0
      %257 = vmatpush1.bf16.msra.mxu0 0
      %258 = vmatprep.subr.bf16.mxu0 0
      %259 = vmatpush1.bf16.msra.mxu0 0
      %260 = vmatprep.subr.bf16.mxu0 0
      %261 = vmatpush1.bf16.msra.mxu0 0
      %262 = vmatprep.subr.bf16.mxu0 0
      %263 = vmatpush1.bf16.msra.mxu0 0
      %264 = vmatprep.subr.bf16.mxu0 0
      %265 = vmatpush1.bf16.msra.mxu0 0
      %266 = vmatprep.subr.bf16.mxu0 0
      %267 = vmatpush1.bf16.msra.mxu0 0
      %268 = vmatprep.subr.bf16.mxu0 0
      %269 = vmatpush1.bf16.msra.mxu0 0
      %270 = vmatprep.subr.bf16.mxu0 0
      %271 = vmatpush1.bf16.msra.mxu0 0
      %272 = vmatprep.subr.bf16.mxu0 0
      %273 = vmatpush1.bf16.msra.mxu0 0
      %274 = vmatprep.mubr.bf16.mxu0 0
      %275 = vmatmul.mubr.bf16.gmra.mrb[0].mxu0 %v240
      %v276 = vpop.f32.mrb[0].mxu0
      %v277 = vadd.f32 %v230, %v276
      %v278 = vpop.f32.mrb[0].mxu0
      %v279 = vpop.f32.mrb[0].mxu0
      %v280 = vpop.f32.mrb[0].mxu0
      %281 = vdwg.mxu0
      %v282 = vmax.f32 %v277, 0.0
      %v283 = vpack.c.bf16 %v282, %v282
      %v284 = vld [vmem:[%s3] sm:$0xf]
      %v285 = vld [vmem:[%s3 + $0x4] sm:$0xf]
      %v286 = vld [vmem:[%s3 + $0x8] sm:$0xf]
      %v287 = vld [vmem:[%s3 + $0xc] sm:$0xf]
      %v288 = vld [vmem:[%s4] sm:$0x1]
      %v290 = vlaneseq
      %v291 = vshrl.u32 %v290, 7
      %v292 = vsub.s32 0, %v291
      %v293 = vrot.slane %v288, %v292
      %v299 = vunpack.c.l.b16 %v284
      %v300 = vunpack.c.l.b16 %v285
      %v301 = vunpack.c.l.b16 %v286
      %v302 = vunpack.c.l.b16 %v287
      %v303 = vpack.c.b16 %v300, %v299
      %v304 = vpack.c.b16 %v302, %v301
      %vm307 = vcmask 261120
      %v309 = vsel %vm307, %v283, 0
      %311 = vmatprep.subr.bf16.mxu0 0
      %312 = vmatpush1.bf16.msra.mxu0 %v303
      %313 = vmatprep.subr.bf16.mxu0 0
      %314 = vmatpush1.bf16.msra.mxu0 %v304
      %315 = vmatprep.subr.bf16.mxu0 0
      %316 = vmatpush1.bf16.msra.mxu0 0
      %317 = vmatprep.subr.bf16.mxu0 0
      %318 = vmatpush1.bf16.msra.mxu0 0
      %319 = vmatprep.subr.bf16.mxu0 0
      %320 = vmatpush1.bf16.msra.mxu0 0
      %321 = vmatprep.subr.bf16.mxu0 0
      %322 = vmatpush1.bf16.msra.mxu0 0
      %323 = vmatprep.subr.bf16.mxu0 0
      %324 = vmatpush1.bf16.msra.mxu0 0
      %325 = vmatprep.subr.bf16.mxu0 0
      %326 = vmatpush1.bf16.msra.mxu0 0
      %327 = vmatprep.subr.bf16.mxu0 0
      %328 = vmatpush1.bf16.msra.mxu0 0
      %329 = vmatprep.subr.bf16.mxu0 0
      %330 = vmatpush1.bf16.msra.mxu0 0
      %331 = vmatprep.subr.bf16.mxu0 0
      %332 = vmatpush1.bf16.msra.mxu0 0
      %333 = vmatprep.subr.bf16.mxu0 0
      %334 = vmatpush1.bf16.msra.mxu0 0
      %335 = vmatprep.subr.bf16.mxu0 0
      %336 = vmatpush1.bf16.msra.mxu0 0
      %337 = vmatprep.subr.bf16.mxu0 0
      %338 = vmatpush1.bf16.msra.mxu0 0
      %339 = vmatprep.subr.bf16.mxu0 0
      %340 = vmatpush1.bf16.msra.mxu0 0
      %341 = vmatprep.subr.bf16.mxu0 0
      %342 = vmatpush1.bf16.msra.mxu0 0
      %343 = vmatprep.mubr.bf16.mxu0 0
      %344 = vmatmul.mubr.bf16.gmra.mrb[0].mxu0 %v309
      %v345 = vpop.f32.mrb[0].mxu0
      %v346 = vadd.f32 %v293, %v345
      %v347 = vpop.f32.mrb[0].mxu0
      %v348 = vpop.f32.mrb[0].mxu0
      %v349 = vpop.f32.mrb[0].mxu0
      %350 = vdwg.mxu0
      %v351 = vxor.u32 %v346, 2147483648
      %v352 = vmul.f32 %v351, 1.442695
      %v353 = vpow.pop %v352
      %v354 = vadd.f32 %v353, 1.0
      %v355 = vrcp.pop %v354
      %v356 = vmul.f32 1.0, %v355
      %vm357 = vcmask 31744
      %358 = vst.msk [vmem:[%s219] sm:$0xff] %vm357, %v356
      %p359 = scmp.lt.s32.totalorder %s16, 7
      %s360 = scalar_select %p359, %s16, 7
      %s361 = smul.addr %s360, 8
      %s362 = scalar_lea.vmem %s5, %s361
      // Predicated region
      $region41: #{simple_nn_forward.1} parent=39 // pred_check
        %p363 = pneg %p144
      $region42: #{simple_nn_forward.1} parent=39 // pred_check_branch
        %365 = sbr.rel (%p363) target = $region44
      $region43: #{simple_nn_forward.1} parent=39 // pred_region
        _
      $region44: #{simple_nn_forward.1} parent=39 // pred_fallthru
        _
    $region40: #{simple_nn_forward.1} parent=5 // pred_fallthru
      _
    %p366 = scmp.le.s32.totalorder 2, %s11
    // Predicated region
    $region45: #{simple_nn_forward.1} parent=5 // pred_check
      %p367 = pneg %p366
    $region46: #{simple_nn_forward.1} parent=5 // pred_check_branch
      %369 = sbr.rel (%p367) target = $region48
    $region47: #{simple_nn_forward.1} parent=5 // pred_region
      %s370 = ssub.s32 %s11, 2
      // Predicated region
      $region49: #{simple_nn_forward.1} parent=47 // pred_check
        %p371 = pneg %p150
      $region50: #{simple_nn_forward.1} parent=47 // pred_check_branch
        %373 = sbr.rel (%p371) target = $region52
      $region51: #{simple_nn_forward.1} parent=47 // pred_region
        %p374 = scmp.lt.s32.totalorder %s17, 7
        %s375 = scalar_select %p374, %s17, 7
        %s376 = smul.addr %s375, 8
        %s377 = scalar_lea.vmem %s5, %s376
      $region52: #{simple_nn_forward.1} parent=47 // pred_fallthru
        _
    $region48: #{simple_nn_forward.1} parent=5 // pred_fallthru
      _
  $region6: #{simple_nn_forward.1} parent=0 // loop_footer
    %s15 = sadd.s32 1, %s11
  $region7: #{simple_nn_forward.1} parent=0 // loop_footer_branch
    %10 = sbr.rel target = $region3
  $region8: #{simple_nn_forward.1} parent=0 // loop_exit
    _

</llo_original>
